<compile_context>
chip_gen: v5e
topology: v5e:2x2
jax: 0.10.0
libtpu: 0.0.40
codegen_flags: <defaults>
</compile_context>

<pallas_src>
import functools
import math

import jax
import jax.numpy as jnp
from jax.experimental import pallas as pl
from jax.experimental.pallas import tpu as pltpu

_LANES = 128


def _round_up(x, m):
    return ((x + m - 1) // m) * m


def _dropout_kernel(seed_ref, x_ref, o_ref, *, drop_prob, tm):
    # Global element index of every element in this tile (uint32, wraps are
    # fine — it only feeds a hash).
    pid = pl.program_id(0)
    base = (pid * (tm * _LANES)).astype(jnp.uint32)
    row = jax.lax.broadcasted_iota(jnp.uint32, (tm, _LANES), 0)
    lane = jax.lax.broadcasted_iota(jnp.uint32, (tm, _LANES), 1)
    gidx = base + row * jnp.uint32(_LANES) + lane

    # Mix in the seed, then murmur3 finalizer for avalanche.
    seed = seed_ref[0].astype(jnp.uint32)
    h = gidx ^ (seed * jnp.uint32(0x9E3779B9))
    h = h ^ (h >> jnp.uint32(16))
    h = h * jnp.uint32(0x85EBCA6B)
    h = h ^ (h >> jnp.uint32(13))
    h = h * jnp.uint32(0xC2B2AE35)
    h = h ^ (h >> jnp.uint32(16))

    # Integer-threshold keep mask: drop with probability drop_prob.
    thresh = jnp.uint32(min(int(round(drop_prob * (1 << 32))), (1 << 32) - 1))
    keep = h >= thresh

    # Scale + select natively in the input dtype (bf16 stays bf16 on v6e/v7x).
    x = x_ref[...]
    scale = jnp.asarray(1.0 / (1.0 - drop_prob), dtype=x.dtype)
    o_ref[...] = jnp.where(keep, x * scale, jnp.zeros_like(x))


def wdropout(x, drop_prob, *, seed=0, training=True):
    """Forward pass matching F.dropout semantics: each element is zeroed
    independently with probability `drop_prob`; survivors are scaled by
    1/(1-drop_prob). Identity in eval mode or if drop_prob <= 0."""
    if (not training) or drop_prob <= 0.0:
        return x

    orig_shape = x.shape
    total = int(math.prod(orig_shape)) if orig_shape else 1

    # Flatten to a lane-dense (rows, 128) slab, padding as needed.
    rows = (total + _LANES - 1) // _LANES
    tm = 512 if rows >= 512 else _round_up(rows, 8)
    rows_padded = _round_up(rows, tm)
    pad = rows_padded * _LANES - total

    flat = x.reshape(-1)
    if pad:
        flat = jnp.pad(flat, (0, pad))
    x2 = flat.reshape(rows_padded, _LANES)

    grid_rows = rows_padded // tm
    seed_arr = jnp.array([seed], dtype=jnp.int32)

    out = pl.pallas_call(
        functools.partial(_dropout_kernel, drop_prob=float(drop_prob), tm=tm),
        out_shape=jax.ShapeDtypeStruct((rows_padded, _LANES), x.dtype),
        grid_spec=pltpu.PrefetchScalarGridSpec(
            num_scalar_prefetch=1,
            grid=(grid_rows,),
            in_specs=[pl.BlockSpec((tm, _LANES), lambda i, seed: (i, 0))],
            out_specs=pl.BlockSpec((tm, _LANES), lambda i, seed: (i, 0)),
        ),
        compiler_params=pltpu.CompilerParams(
            dimension_semantics=("parallel",)  # shard row tiles across v7x TCs
        ),
    )(seed_arr, x2)

    out = out.reshape(-1)
    if pad:
        out = out[:total]
    return out.reshape(orig_shape)


if __name__ == "__main__":
    key = jax.random.PRNGKey(0)
    # Small NCHW input consistent with the module's documented shape.
    x = jax.random.normal(key, (2, 4, 16, 16), dtype=jnp.float32)
    drop_prob = 0.25

    # Training-mode forward (dropout applied).
    y = wdropout(x, drop_prob, seed=0, training=True)
    y = jax.block_until_ready(y)

    # Eval-mode forward (identity), mirrors the `self.training == False` branch.
    y_eval = wdropout(x, drop_prob, training=False)
    y_eval = jax.block_until_ready(y_eval)

    # Basic sanity checks on dropout semantics.
    assert y.shape == x.shape and y.dtype == x.dtype
    zero_frac = float(jnp.mean(y == 0.0))
    assert 0.05 < zero_frac < 0.6, f"unexpected drop fraction {zero_frac}"
    # Surviving elements are x / (1 - p).
    mask = y != 0.0
    scaled_ok = jnp.allclose(
        jnp.where(mask, y, 0.0),
        jnp.where(mask, x / (1.0 - drop_prob), 0.0),
        rtol=1e-5, atol=1e-5,
    )
    assert bool(scaled_ok)
    assert bool(jnp.array_equal(y_eval, x))

    print("KERNEL_OK")
</pallas_src>

<mosaic_0001>
module attributes {stable_mosaic.version = 11 : i64} {
  func.func @_dropout_kernel(%arg0: i32, %arg1: memref<1xi32, #tpu.memory_space<smem>>, %arg2: memref<16x128xf32, #tpu.memory_space<vmem>>, %arg3: memref<16x128xf32, #tpu.memory_space<vmem>>) attributes {dimension_semantics = [#tpu.dimension_semantics<parallel>], iteration_bounds = array<i64: 1>, scalar_prefetch = 1 : i64, scratch_operands = 0 : i64, tpu.core_type = #tpu.core_type<tc>, window_params = [{transform_indices = @transform_0, window_bounds = array<i64: 16, 128>}, {transform_indices = @transform_1, window_bounds = array<i64: 16, 128>}]} {
    %c2048_i32 = arith.constant 2048 : i32
    %0 = arith.muli %arg0, %c2048_i32 : i32
    %1 = tpu.iota {dimensions = array<i32: 0>} : vector<16x128xi32>
    %2 = tpu.iota {dimensions = array<i32: 1>} : vector<16x128xi32>
    %c128_i32 = arith.constant 128 : i32
    %3 = vector.broadcast %c128_i32 : i32 to vector<16x128xi32>
    %4 = arith.muli %1, %3 : vector<16x128xi32>
    %5 = vector.broadcast %0 : i32 to vector<16x128xi32>
    %6 = arith.addi %5, %4 : vector<16x128xi32>
    %7 = arith.addi %6, %2 : vector<16x128xi32>
    %c0 = arith.constant 0 : index
    %8 = memref.load %arg1[%c0] : memref<1xi32, #tpu.memory_space<smem>>
    %c-1640531527_i32 = arith.constant -1640531527 : i32
    %9 = arith.muli %8, %c-1640531527_i32 : i32
    %10 = vector.broadcast %9 : i32 to vector<16x128xi32>
    %11 = arith.xori %7, %10 : vector<16x128xi32>
    %c16_i32 = arith.constant 16 : i32
    %12 = vector.broadcast %c16_i32 : i32 to vector<16x128xi32>
    %13 = arith.shrui %11, %12 : vector<16x128xi32>
    %14 = arith.xori %11, %13 : vector<16x128xi32>
    %c-2048144789_i32 = arith.constant -2048144789 : i32
    %15 = vector.broadcast %c-2048144789_i32 : i32 to vector<16x128xi32>
    %16 = arith.muli %14, %15 : vector<16x128xi32>
    %c13_i32 = arith.constant 13 : i32
    %17 = vector.broadcast %c13_i32 : i32 to vector<16x128xi32>
    %18 = arith.shrui %16, %17 : vector<16x128xi32>
    %19 = arith.xori %16, %18 : vector<16x128xi32>
    %c-1028477387_i32 = arith.constant -1028477387 : i32
    %20 = vector.broadcast %c-1028477387_i32 : i32 to vector<16x128xi32>
    %21 = arith.muli %19, %20 : vector<16x128xi32>
    %c16_i32_0 = arith.constant 16 : i32
    %22 = vector.broadcast %c16_i32_0 : i32 to vector<16x128xi32>
    %23 = arith.shrui %21, %22 : vector<16x128xi32>
    %24 = arith.xori %21, %23 : vector<16x128xi32>
    %c1073741824_i32 = arith.constant 1073741824 : i32
    %25 = vector.broadcast %c1073741824_i32 : i32 to vector<16x128xi32>
    %26 = arith.cmpi uge, %24, %25 : vector<16x128xi32>
    %c0_1 = arith.constant 0 : index
    %c0_2 = arith.constant 0 : index
    %27 = vector.load %arg2[%c0_1, %c0_2] : memref<16x128xf32, #tpu.memory_space<vmem>>, vector<16x128xf32>
    %cst = arith.constant 1.33333337 : f32
    %28 = vector.broadcast %cst : f32 to vector<16x128xf32>
    %29 = arith.mulf %27, %28 : vector<16x128xf32>
    %cst_3 = arith.constant 0.000000e+00 : f32
    %30 = vector.broadcast %cst_3 : f32 to vector<16x128xf32>
    %31 = arith.select %26, %29, %30 : vector<16x128xi1>, vector<16x128xf32>
    %c0_4 = arith.constant 0 : index
    %c0_5 = arith.constant 0 : index
    %32 = vector.load %arg3[%c0_4, %c0_5] : memref<16x128xf32, #tpu.memory_space<vmem>>, vector<16x128xf32>
    tpu.vector_store %arg3[%c0_4, %c0_5], %31 {strides = array<i32>} : memref<16x128xf32, #tpu.memory_space<vmem>>, vector<16x128xf32>,
    return
  }
  func.func @transform_0(%arg0: i32, %arg1: memref<1xi32, #tpu.memory_space<smem>>) -> (i32, i32) {
    %c0_i32 = arith.constant 0 : i32
    %c0_i32_0 = arith.constant 0 : i32
    return %arg0, %c0_i32 : i32, i32
  }
  func.func @transform_1(%arg0: i32, %arg1: memref<1xi32, #tpu.memory_space<smem>>) -> (i32, i32) {
    %c0_i32 = arith.constant 0 : i32
    %c0_i32_0 = arith.constant 0 : i32
    return %arg0, %c0_i32 : i32, i32
  }
}

</mosaic_0001>

<llo_original>
// kernel: tpu_custom_call.1
$region0: #{tpu_custom_call.1}
  #allocation0 [shape = 'u32[]', space=smem, size = 0x4, offset = 0x4, fixed_abs, tag = 'smem constant byte address 0x4 - core index']
  #allocation1 [shape = 'u32[72,128]{1,0:T(1,128)}', space=vmem, size = 0x9000, scoped, tag = 'internal scratch']
  #allocation2 [shape = 's32[1]{0}', space=sflag, size = 0x4, scoped, tag = 'scoped memory for tpu_custom_call.1']
  #allocation3 [shape = 's32[1]{0:T(128)S(6)}', space=smem, size = 0x200, scoped, tag = 'prefetched SMEM operand 0']
  %s0 = inlined_call_operand.<no memory space> [shape: s32[1], index: 0, kind: input, shape index: {}]
  %s1 = inlined_call_operand.hbm [shape: f32[16,128], index: 1, kind: input, shape index: {}]
  %s2 = inlined_call_operand.hbm [shape: f32[16,128], index: 2, kind: output, shape index: {}]
  %s3 = sld [smem:[#allocation0]]
  $region18: #{tpu_custom_call.1} parent=0
    _
  %s5 = ssub.s32 1, %s3
  %s6 = scalar_select 0, %s5, %s3
  %7 = sst [smem:[#allocation3]] %s0
  $region1: #{tpu_custom_call.1} parent=0
    #allocation4 [shape = 'u8[8192]{0}', space=vmem, size = 0x2000, scoped, tag = 'input window, operand 1, single buffered']
    #allocation5 [shape = 's32[1]{0}', space=sflag, size = 0x4, scoped, tag = 'scoped memory for tpu_custom_call.1']
    #allocation6 [shape = 's32[1]{0}', space=sflag, size = 0x4, scoped, tag = 'scoped memory for tpu_custom_call.1']
    #allocation7 [shape = 'u8[8192]{0}', space=vmem, size = 0x2000, scoped, tag = 'output window, operand 0, single buffered']
    %8 = vsyncpa [#allocation5], 0
    %9 = vsyncpa [#allocation6], 0
    // Predicated region
    $region2: #{tpu_custom_call.1} parent=1 // pred_check
      _
    $region3: #{tpu_custom_call.1} parent=1 // pred_check_branch
      %11 = sbr.rel (0) target = $region5
    $region4: #{tpu_custom_call.1} parent=1 // pred_region
      %13 = vsyncadd [#allocation5], 0
      %s14 = sshll.u32 %s1, 4
      %s15 = int_to_ptr.hbm [resolvable:$true] %s14
      %s16 = sshll.u32 [#allocation4], 4
      %s17 = int_to_ptr.vmem [resolvable:$true] %s16
      %22 = dma.hbm_to_vmem [thread:$0]  %s15, 256, %s17, [#allocation5], 128, 128, 8
    $region5: #{tpu_custom_call.1} parent=1 // pred_fallthru
      _
    // Predicated region
    $region6: #{tpu_custom_call.1} parent=1 // pred_check
      _
    $region7: #{tpu_custom_call.1} parent=1 // pred_check_branch
      %24 = sbr.rel (0) target = $region9
    $region8: #{tpu_custom_call.1} parent=1 // pred_region
      %26 = dma.done [#allocation5], 256
    $region9: #{tpu_custom_call.1} parent=1 // pred_fallthru
      _
    %s27 = smul.u32 0, 2048
    %v28 = vlaneseq
    %v29 = vshrl.u32 %v28, 7
    %v30 = vadd.s32 %v29, 8
    %v31 = vlaneseq
    %v32 = vand.u32 %v31, 127
    %v33 = vmul.u32 %v29, 128
    %v34 = vmul.u32 %v30, 128
    %v35 = vstv %s27
    %v36 = vadd.s32 %v35, %v33
    %v37 = vadd.s32 %v35, %v34
    %v38 = vadd.s32 %v36, %v32
    %v39 = vadd.s32 %v37, %v32
    %s40 = sld [smem:[#allocation3]]
    %s41 = smul.u32 %s40, 2654435769
    %v42 = vstv %s41
    %v43 = vxor.u32 %v38, %v42
    %v44 = vxor.u32 %v39, %v42
    %v45 = vshrl.u32 %v43, 16
    %v46 = vshrl.u32 %v44, 16
    %v47 = vxor.u32 %v43, %v45
    %v48 = vxor.u32 %v44, %v46
    %v49 = vmul.u32 %v47, 2246822507
    %v50 = vmul.u32 %v48, 2246822507
    %v51 = vshrl.u32 %v49, 13
    %v52 = vshrl.u32 %v50, 13
    %v53 = vxor.u32 %v49, %v51
    %v54 = vxor.u32 %v50, %v52
    %v55 = vmul.u32 %v53, 3266489909
    %v56 = vmul.u32 %v54, 3266489909
    %v57 = vshrl.u32 %v55, 16
    %v58 = vshrl.u32 %v56, 16
    %v59 = vxor.u32 %v55, %v57
    %v60 = vxor.u32 %v56, %v58
    %v61 = vadd.s32 %v59, 2147483648
    %vm63 = vcmp.ge.s32.totalorder %v61, 3221225472
    %v64 = vadd.s32 %v60, 2147483648
    %vm66 = vcmp.ge.s32.totalorder %v64, 3221225472
    %v67 = vld [vmem:[#allocation4] sm:$0xff]
    %v68 = vld [vmem:[#allocation4 + $0x8] sm:$0xff]
    %v69 = vmul.f32 %v67, 1.3333334
    %v70 = vmul.f32 %v68, 1.3333334
    %v71 = vsel %vm63, %v69, 0.0
    %v72 = vsel %vm66, %v70, 0.0
    %73 = vst [vmem:[#allocation7] sm:$0xff] %v71
    %74 = vst [vmem:[#allocation7 + $0x8] sm:$0xff] %v72
    // Predicated region
    $region10: #{tpu_custom_call.1} parent=1 // pred_check
      _
    $region11: #{tpu_custom_call.1} parent=1 // pred_check_branch
      %76 = sbr.rel (0) target = $region13
    $region12: #{tpu_custom_call.1} parent=1 // pred_region
      %78 = vsyncadd [#allocation6], 0
      %s79 = sshll.u32 [#allocation7], 4
      %s80 = int_to_ptr.vmem [resolvable:$true] %s79
      %s81 = sshll.u32 %s2, 4
      %s82 = int_to_ptr.hbm [resolvable:$true] %s81
      %87 = dma.vmem_to_hbm [thread:$0]  %s80, 256, %s82, [#allocation6], 128, 128, 8
    $region13: #{tpu_custom_call.1} parent=1 // pred_fallthru
      _
    // Predicated region
    $region14: #{tpu_custom_call.1} parent=1 // pred_check
      _
    $region15: #{tpu_custom_call.1} parent=1 // pred_check_branch
      %89 = sbr.rel (0) target = $region17
    $region16: #{tpu_custom_call.1} parent=1 // pred_region
      %91 = dma.done [#allocation6], 256
    $region17: #{tpu_custom_call.1} parent=1 // pred_fallthru
      _
    %92 = vsyncpa [#allocation5], 1
    %93 = vsyncpa [#allocation6], 1

</llo_original>
